<compile_context>
chip_gen: v7x
topology: tpu7x:2x2x1
jax: 0.10.0
libtpu: 0.0.40
codegen_flags: <defaults>
</compile_context>

<pallas_src>
import functools

import numpy as np
import jax
import jax.numpy as jnp
from jax.experimental import pallas as pl
from jax.experimental.pallas import tpu as pltpu


def _round_up(n, m):
    return ((n + m - 1) // m) * m


# --------------------------------------------------------------------------- kernel
def _convelm_kernel(x_ref, a1_ref, b1_ref, a2_ref, b2_ref, fw1t_ref, fb1_ref,
                    fw2_ref, o_ref, *, half1, half2):
    """One batch tile of TB samples.

    Each conv1d + max_pool1d(2) + relu stage is a single bf16 matmul against a fused
    [even-tap | odd-tap] Toeplitz matrix (each half zero-padded to a multiple of 128
    lanes so the split is a free vreg-boundary slice), followed by a per-half max,
    bias add and ReLU in f32.
    """
    x = x_ref[...]                                                   # (TB, C0*W) bf16

    # ---- stage 1: conv1 + max_pool1d(2) + relu ------------------------------------
    y1 = jnp.dot(x, a1_ref[...], preferred_element_type=jnp.float32)      # (TB, 2*half1)
    h1 = jnp.maximum(jnp.maximum(y1[:, :half1], y1[:, half1:]) + b1_ref[...], 0.0)
    h1 = h1.astype(jnp.bfloat16)                                          # (TB, half1)

    # ---- stage 2: conv2 + max_pool1d(2) + relu ------------------------------------
    y2 = jnp.dot(h1, a2_ref[...], preferred_element_type=jnp.float32)     # (TB, 2*half2)
    h2 = jnp.maximum(jnp.maximum(y2[:, :half2], y2[:, half2:]) + b2_ref[...], 0.0)
    h2 = h2.astype(jnp.bfloat16)                                          # (TB, half2)

    # ---- fc1 (+bias) + relu ---------------------------------------------------------
    z = jnp.dot(h2, fw1t_ref[...], preferred_element_type=jnp.float32)    # (TB, H)
    z = jnp.maximum(z + fb1_ref[...], 0.0).astype(jnp.bfloat16)

    # ---- fc2 (no bias), emitted as a lane-dense (1, TB) row --------------------------
    # out[0, n] = sum_h fw2[0, h] * z[n, h]; contraction on dim 1 of both operands.
    # Any implicit transpose of z is XLU work, hidden under HBM/MXU slack.
    o_ref[...] = jax.lax.dot_general(
        fw2_ref[...], z,
        dimension_numbers=(((1,), (1,)), ((), ())),
        preferred_element_type=jnp.float32)                               # (1, TB)


# --------------------------------------------------------------------- host-side prep
def _conv_pool_matrix(w, in_len, rows_pad, n_pool, half):
    """Fold conv1d(stride 1, valid) + max_pool1d(kernel=2, stride=2) tap selection into
    one fused Toeplitz matrix of shape (rows_pad, 2*half):

      columns [0, Cout*n_pool)            -> even pool tap  (conv position 2p)
      columns [half, half + Cout*n_pool)  -> odd  pool tap  (conv position 2p+1)

      A[c*in_len + (l+k), j*half + o*n_pool + p] = w[o, c, k],   l = 2p + j

    Rows >= Cin*in_len and the per-half column padding are zero, so padded columns of
    the previous stage and padded columns of this stage contribute exactly nothing.
    Any trailing odd conv position is dropped, matching floor-mode max_pool1d.
    """
    Cout, Cin, K = w.shape
    A = np.zeros((rows_pad, 2 * half), np.float32)
    for j in (0, 1):
        for o in range(Cout):
            for c in range(Cin):
                for p in range(n_pool):
                    l = 2 * p + j
                    col = j * half + o * n_pool + p
                    A[c * in_len + l:c * in_len + l + K, col] = w[o, c, :]
    return A


def prepare_params(w1, b1, w2, b2, fw1, fb1, fw2, win_len):
    """Convert PyTorch-layout parameters into kernel-friendly layouts (host side).

    Matmul operands are returned in bf16 (f32 accumulation happens in-kernel);
    biases stay f32.
    """
    w1 = np.asarray(w1, np.float32)
    w2 = np.asarray(w2, np.float32)
    C1, C0, K1 = w1.shape
    C2, _, K2 = w2.shape
    L1 = win_len - K1 + 1
    P1 = L1 // 2
    L2 = P1 - K2 + 1
    P2 = L2 // 2
    F = C2 * P2                                   # flatten_width
    half1 = _round_up(C1 * P1, 128)               # padded per-tap width, stage 1
    half2 = _round_up(F, 128)                     # padded per-tap width, stage 2

    a1 = _conv_pool_matrix(w1, win_len, C0 * win_len, P1, half1)   # (C0*W, 2*half1)
    a2 = _conv_pool_matrix(w2, P1, half1, P2, half2)               # (half1, 2*half2)

    b1row = np.zeros((1, half1), np.float32)
    b1row[0, :C1 * P1] = np.repeat(np.asarray(b1, np.float32), P1)
    b2row = np.zeros((1, half2), np.float32)
    b2row[0, :F] = np.repeat(np.asarray(b2, np.float32), P2)

    fw1 = np.asarray(fw1, np.float32)              # (H, F)
    H = fw1.shape[0]
    fw1t = np.zeros((half2, H), np.float32)        # zero rows past F
    fw1t[:F, :] = fw1.T
    fb1row = np.asarray(fb1, np.float32)[None, :]  # (1, H)
    fw2_2d = np.asarray(fw2, np.float32).reshape(1, H)

    bf = lambda a: jnp.asarray(a, jnp.bfloat16)
    f32 = lambda a: jnp.asarray(a, jnp.float32)
    return dict(a1=bf(a1), b1=f32(b1row), a2=bf(a2), b2=f32(b2row),
                fw1t=bf(fw1t), fb1=f32(fb1row), fw2=bf(fw2_2d),
                half1=half1, half2=half2)


# ------------------------------------------------------------------------- forward
def convelm_forward(x, params, *, tb=4096):
    """x: (N, C0, W); params from prepare_params(). Returns (N, 1) f32.

    tb: batch tile per grid step (sweep 1024/2048/4096/8192 per chip generation;
    at tb=8192 also raise vmem_limit_bytes for v5e's 16 MiB default scope).
    """
    a1, b1, a2, b2 = params["a1"], params["b1"], params["a2"], params["b2"]
    fw1t, fb1, fw2 = params["fw1t"], params["fb1"], params["fw2"]
    half1, half2 = params["half1"], params["half2"]

    N, C0, W = x.shape
    F_in = C0 * W

    xf = x.reshape(N, F_in)
    if xf.dtype != jnp.bfloat16:
        # TODO(synk): produce x in bf16 upstream to avoid this extra HBM pass.
        xf = xf.astype(jnp.bfloat16)

    # No full-array padding.  Only tiny batches get rounded up to the sublane
    # multiple (negligible copy); large batches use Pallas's partial edge block —
    # every output row depends only on its own input row, and padded/garbage tail
    # rows are sliced off below.
    Npad = N
    if N % 8 != 0 and N <= 1024:
        Npad = _round_up(N, 8)
        xf = jnp.pad(xf, ((0, Npad - N), (0, 0)))

    tb_eff = max(8, min(tb, _round_up(Npad, 8)))
    if pl.cdiv(Npad, tb_eff) == 1 and Npad >= 2048:
        # Keep >= 2 grid blocks so v7x's second TensorCore gets work.
        tb_eff = max(8, _round_up(pl.cdiv(Npad, 2), 8))
    nb = pl.cdiv(Npad, tb_eff)

    const = lambda shape: pl.BlockSpec(shape, lambda b: (0, 0))

    out = pl.pallas_call(
        functools.partial(_convelm_kernel, half1=half1, half2=half2),
        out_shape=jax.ShapeDtypeStruct((nb, 1, tb_eff), jnp.float32),
        grid_spec=pltpu.PrefetchScalarGridSpec(
            num_scalar_prefetch=0,
            grid=(nb,),
            in_specs=[
                pl.BlockSpec((tb_eff, F_in), lambda b: (b, 0)),    # batch tile of x
                const(a1.shape), const(b1.shape),
                const(a2.shape), const(b2.shape),
                const(fw1t.shape), const(fb1.shape), const(fw2.shape),
            ],
            out_specs=pl.BlockSpec((None, 1, tb_eff), lambda b: (b, 0, 0)),  # lane-dense
        ),
        compiler_params=pltpu.CompilerParams(
            dimension_semantics=("parallel",)),
    )(xf, a1, b1, a2, b2, fw1t, fb1, fw2)

    return out.reshape(nb * tb_eff, 1)[:N]


# ------------------------------------------------------------------------ reference
def reference_forward(x, w1, b1, w2, b2, fw1, fb1, fw2):
    """Pure-JAX f32 reference mirroring the PyTorch forward (PyTorch weight layout)."""
    def conv1d(x, w, b):
        K = w.shape[2]
        Lout = x.shape[2] - K + 1
        out = jnp.zeros((x.shape[0], w.shape[0], Lout), jnp.float32) + b[None, :, None]
        for k in range(K):
            out = out + jnp.einsum('nil,oi->nol', x[:, :, k:k + Lout], w[:, :, k])
        return out

    def pool_relu(x):
        N, C, L = x.shape
        P = L // 2
        x = x[:, :, :2 * P].reshape(N, C, P, 2).max(axis=3)
        return jnp.maximum(x, 0.0)

    h = pool_relu(conv1d(x, w1, b1))
    h = pool_relu(conv1d(h, w2, b2))
    flat = h.reshape(h.shape[0], -1)
    z = jnp.maximum(flat @ fw1.T + fb1[None, :], 0.0)
    return z @ fw2.T


if __name__ == "__main__":
    # Small shapes consistent with the module's constructor arithmetic.
    feat_len, win_len = 4, 16
    conv1_ch_mul, K1 = 2, 3
    conv2_ch_mul, K2 = 2, 3
    lin_mul = 2
    N = 2

    C0 = feat_len
    C1 = feat_len * conv1_ch_mul                 # conv1 out channels
    C2 = C1 * conv2_ch_mul                       # conv2 out channels
    L1 = win_len - K1 + 1
    P1 = L1 // 2
    L2 = P1 - K2 + 1
    P2 = L2 // 2
    F = C2 * P2                                  # flatten_width
    H = lin_mul * F                              # fc1 hidden width

    key = jax.random.PRNGKey(0)
    ks = jax.random.split(key, 8)
    x = jax.random.normal(ks[0], (N, C0, win_len), jnp.float32)
    # PyTorch-layout parameters (deterministic synthetic init).
    w1 = jax.random.normal(ks[1], (C1, C0, K1), jnp.float32) * 0.1    # conv1.weight
    b1 = jax.random.normal(ks[2], (C1,), jnp.float32) * 0.1           # conv1.bias
    w2 = jax.random.normal(ks[3], (C2, C1, K2), jnp.float32) * 0.1    # conv2.weight
    b2 = jax.random.normal(ks[4], (C2,), jnp.float32) * 0.1           # conv2.bias
    fw1 = jax.random.normal(ks[5], (H, F), jnp.float32) * 0.1         # fc1.weight
    fb1 = jax.random.normal(ks[6], (H,), jnp.float32) * 0.1           # fc1.bias
    fw2 = jax.random.normal(ks[7], (1, H), jnp.float32) * 0.1         # fc2.weight (no bias)

    params = prepare_params(np.asarray(w1), np.asarray(b1), np.asarray(w2),
                            np.asarray(b2), np.asarray(fw1), np.asarray(fb1),
                            np.asarray(fw2), win_len)

    out = convelm_forward(x, params, tb=4096)
    out = jax.block_until_ready(out)

    ref = reference_forward(x, w1, b1, w2, b2, fw1, fb1, fw2)
    assert out.shape == (N, 1)
    # bf16 operands + Toeplitz reassociation -> compare against the f32 reference
    # with a loose (but bug-catching) tolerance.
    assert jnp.allclose(out, ref, atol=2e-2, rtol=2e-2), (out, ref)
    print("KERNEL_OK")
</pallas_src>

<mosaic_0001>
module attributes {stable_mosaic.version = 11 : i64} {
  func.func @_convelm_kernel(%arg0: i32, %arg1: memref<8x64xbf16, #tpu.memory_space<vmem>>, %arg2: memref<64x256xbf16, #tpu.memory_space<vmem>>, %arg3: memref<1x128xf32, #tpu.memory_space<vmem>>, %arg4: memref<128x256xbf16, #tpu.memory_space<vmem>>, %arg5: memref<1x128xf32, #tpu.memory_space<vmem>>, %arg6: memref<128x64xbf16, #tpu.memory_space<vmem>>, %arg7: memref<1x64xf32, #tpu.memory_space<vmem>>, %arg8: memref<1x64xbf16, #tpu.memory_space<vmem>>, %arg9: memref<1x1x8xf32, #tpu.memory_space<vmem>>) attributes {dimension_semantics = [#tpu.dimension_semantics<parallel>], iteration_bounds = array<i64: 1>, scalar_prefetch = 0 : i64, scratch_operands = 0 : i64, tpu.core_type = #tpu.core_type<tc>, window_params = [{transform_indices = @transform_0, window_bounds = array<i64: 8, 64>}, {pipeline_mode = #tpu.pipeline_mode<synchronous>, transform_indices = @transform_1, window_bounds = array<i64: 64, 256>}, {pipeline_mode = #tpu.pipeline_mode<synchronous>, transform_indices = @transform_2, window_bounds = array<i64: 1, 128>}, {pipeline_mode = #tpu.pipeline_mode<synchronous>, transform_indices = @transform_3, window_bounds = array<i64: 128, 256>}, {pipeline_mode = #tpu.pipeline_mode<synchronous>, transform_indices = @transform_4, window_bounds = array<i64: 1, 128>}, {pipeline_mode = #tpu.pipeline_mode<synchronous>, transform_indices = @transform_5, window_bounds = array<i64: 128, 64>}, {pipeline_mode = #tpu.pipeline_mode<synchronous>, transform_indices = @transform_6, window_bounds = array<i64: 1, 64>}, {pipeline_mode = #tpu.pipeline_mode<synchronous>, transform_indices = @transform_7, window_bounds = array<i64: 1, 64>}, {transform_indices = @transform_8, window_bounds = array<i64: 1, 1, 8>}]} {
    %c0 = arith.constant 0 : index
    %c0_0 = arith.constant 0 : index
    %0 = vector.load %arg1[%c0, %c0_0] : memref<8x64xbf16, #tpu.memory_space<vmem>>, vector<8x64xbf16>
    %c0_1 = arith.constant 0 : index
    %c0_2 = arith.constant 0 : index
    %1 = vector.load %arg2[%c0_1, %c0_2] : memref<64x256xbf16, #tpu.memory_space<vmem>>, vector<64x256xbf16>
    %cst = arith.constant dense<0.000000e+00> : vector<8x256xf32>
    %2 = tpu.matmul %0, %1, %cst {dimension_numbers = #tpu.dot_dimension_numbers<[1], [0], [0], [1], [0, 0, 1, 1], [], []>} : vector<8x64xbf16>, vector<64x256xbf16>, vector<8x256xf32> -> vector<8x256xf32>
    %3 = vector.extract_strided_slice %2 {offsets = [0, 0], sizes = [8, 128], strides = [1, 1]} : vector<8x256xf32> to vector<8x128xf32>
    %4 = vector.extract_strided_slice %2 {offsets = [0, 128], sizes = [8, 128], strides = [1, 1]} : vector<8x256xf32> to vector<8x128xf32>
    %5 = arith.maximumf %3, %4 : vector<8x128xf32>
    %c0_3 = arith.constant 0 : index
    %c0_4 = arith.constant 0 : index
    %6 = vector.load %arg3[%c0_3, %c0_4] : memref<1x128xf32, #tpu.memory_space<vmem>>, vector<1x128xf32>
    %7 = vector.broadcast %6 : vector<1x128xf32> to vector<8x128xf32>
    %8 = arith.addf %5, %7 : vector<8x128xf32>
    %cst_5 = arith.constant 0.000000e+00 : f32
    %9 = vector.broadcast %cst_5 : f32 to vector<8x128xf32>
    %10 = arith.maximumf %8, %9 : vector<8x128xf32>
    %11 = arith.truncf %10 : vector<8x128xf32> to vector<8x128xbf16>
    %c0_6 = arith.constant 0 : index
    %c0_7 = arith.constant 0 : index
    %12 = vector.load %arg4[%c0_6, %c0_7] : memref<128x256xbf16, #tpu.memory_space<vmem>>, vector<128x256xbf16>
    %cst_8 = arith.constant dense<0.000000e+00> : vector<8x256xf32>
    %13 = tpu.matmul %11, %12, %cst_8 {dimension_numbers = #tpu.dot_dimension_numbers<[1], [0], [0], [1], [0, 0, 1, 1], [], []>} : vector<8x128xbf16>, vector<128x256xbf16>, vector<8x256xf32> -> vector<8x256xf32>
    %14 = vector.extract_strided_slice %13 {offsets = [0, 0], sizes = [8, 128], strides = [1, 1]} : vector<8x256xf32> to vector<8x128xf32>
    %15 = vector.extract_strided_slice %13 {offsets = [0, 128], sizes = [8, 128], strides = [1, 1]} : vector<8x256xf32> to vector<8x128xf32>
    %16 = arith.maximumf %14, %15 : vector<8x128xf32>
    %c0_9 = arith.constant 0 : index
    %c0_10 = arith.constant 0 : index
    %17 = vector.load %arg5[%c0_9, %c0_10] : memref<1x128xf32, #tpu.memory_space<vmem>>, vector<1x128xf32>
    %18 = vector.broadcast %17 : vector<1x128xf32> to vector<8x128xf32>
    %19 = arith.addf %16, %18 : vector<8x128xf32>
    %cst_11 = arith.constant 0.000000e+00 : f32
    %20 = vector.broadcast %cst_11 : f32 to vector<8x128xf32>
    %21 = arith.maximumf %19, %20 : vector<8x128xf32>
    %22 = arith.truncf %21 : vector<8x128xf32> to vector<8x128xbf16>
    %c0_12 = arith.constant 0 : index
    %c0_13 = arith.constant 0 : index
    %23 = vector.load %arg6[%c0_12, %c0_13] : memref<128x64xbf16, #tpu.memory_space<vmem>>, vector<128x64xbf16>
    %cst_14 = arith.constant dense<0.000000e+00> : vector<8x64xf32>
    %24 = tpu.matmul %22, %23, %cst_14 {dimension_numbers = #tpu.dot_dimension_numbers<[1], [0], [0], [1], [0, 0, 1, 1], [], []>} : vector<8x128xbf16>, vector<128x64xbf16>, vector<8x64xf32> -> vector<8x64xf32>
    %c0_15 = arith.constant 0 : index
    %c0_16 = arith.constant 0 : index
    %25 = vector.load %arg7[%c0_15, %c0_16] : memref<1x64xf32, #tpu.memory_space<vmem>>, vector<1x64xf32>
    %26 = vector.broadcast %25 : vector<1x64xf32> to vector<8x64xf32>
    %27 = arith.addf %24, %26 : vector<8x64xf32>
    %cst_17 = arith.constant 0.000000e+00 : f32
    %28 = vector.broadcast %cst_17 : f32 to vector<8x64xf32>
    %29 = arith.maximumf %27, %28 : vector<8x64xf32>
    %30 = arith.truncf %29 : vector<8x64xf32> to vector<8x64xbf16>
    %c0_18 = arith.constant 0 : index
    %c0_19 = arith.constant 0 : index
    %31 = vector.load %arg8[%c0_18, %c0_19] : memref<1x64xbf16, #tpu.memory_space<vmem>>, vector<1x64xbf16>
    %cst_20 = arith.constant dense<0.000000e+00> : vector<1x8xf32>
    %32 = tpu.matmul %31, %30, %cst_20 {dimension_numbers = #tpu.dot_dimension_numbers<[1], [1], [0], [0], [0, 0, 1, 0], [], []>} : vector<1x64xbf16>, vector<8x64xbf16>, vector<1x8xf32> -> vector<1x8xf32>
    %c0_21 = arith.constant 0 : index
    %c0_22 = arith.constant 0 : index
    %c0_23 = arith.constant 0 : index
    %33 = vector.load %arg9[%c0_21, %c0_22, %c0_23] : memref<1x1x8xf32, #tpu.memory_space<vmem>>, vector<1x1x8xf32>
    %34 = vector.shape_cast %33 : vector<1x1x8xf32> to vector<1x8xf32>
    %35 = vector.shape_cast %32 : vector<1x8xf32> to vector<1x1x8xf32>
    tpu.vector_store %arg9[%c0_21, %c0_22, %c0_23], %35 {strides = array<i32>} : memref<1x1x8xf32, #tpu.memory_space<vmem>>, vector<1x1x8xf32>,
    return
  }
  func.func @transform_0(%arg0: i32) -> (i32, i32) {
    %c0_i32 = arith.constant 0 : i32
    %c0_i32_0 = arith.constant 0 : i32
    return %arg0, %c0_i32 : i32, i32
  }
  func.func @transform_1(%arg0: i32) -> (i32, i32) {
    %c0_i32 = arith.constant 0 : i32
    %c0_i32_0 = arith.constant 0 : i32
    %c0_i32_1 = arith.constant 0 : i32
    return %c0_i32, %c0_i32_0 : i32, i32
  }
  func.func @transform_2(%arg0: i32) -> (i32, i32) {
    %c0_i32 = arith.constant 0 : i32
    %c0_i32_0 = arith.constant 0 : i32
    %c0_i32_1 = arith.constant 0 : i32
    return %c0_i32, %c0_i32_0 : i32, i32
  }
  func.func @transform_3(%arg0: i32) -> (i32, i32) {
    %c0_i32 = arith.constant 0 : i32
    %c0_i32_0 = arith.constant 0 : i32
    %c0_i32_1 = arith.constant 0 : i32
    return %c0_i32, %c0_i32_0 : i32, i32
  }
  func.func @transform_4(%arg0: i32) -> (i32, i32) {
    %c0_i32 = arith.constant 0 : i32
    %c0_i32_0 = arith.constant 0 : i32
    %c0_i32_1 = arith.constant 0 : i32
    return %c0_i32, %c0_i32_0 : i32, i32
  }
  func.func @transform_5(%arg0: i32) -> (i32, i32) {
    %c0_i32 = arith.constant 0 : i32
    %c0_i32_0 = arith.constant 0 : i32
    %c0_i32_1 = arith.constant 0 : i32
    return %c0_i32, %c0_i32_0 : i32, i32
  }
  func.func @transform_6(%arg0: i32) -> (i32, i32) {
    %c0_i32 = arith.constant 0 : i32
    %c0_i32_0 = arith.constant 0 : i32
    %c0_i32_1 = arith.constant 0 : i32
    return %c0_i32, %c0_i32_0 : i32, i32
  }
  func.func @transform_7(%arg0: i32) -> (i32, i32) {
    %c0_i32 = arith.constant 0 : i32
    %c0_i32_0 = arith.constant 0 : i32
    %c0_i32_1 = arith.constant 0 : i32
    return %c0_i32, %c0_i32_0 : i32, i32
  }
  func.func @transform_8(%arg0: i32) -> (i32, i32, i32) {
    %c0_i32 = arith.constant 0 : i32
    %c0_i32_0 = arith.constant 0 : i32
    %c0_i32_1 = arith.constant 0 : i32
    return %arg0, %c0_i32, %c0_i32_0 : i32, i32, i32
  }
}

</mosaic_0001>

<llo_original>
// kernel: tpu_custom_call.1
$region0: #{tpu_custom_call.1}
  #allocation0 [shape = 'u32[]', space=smem, size = 0x4, offset = 0x4, fixed_abs, tag = 'smem constant byte address 0x4 - core index']
  #allocation1 [shape = 'u32[144,128]{1,0:T(1,128)}', space=vmem, size = 0x12000, scoped, tag = 'internal scratch']
  %s0 = inlined_call_operand.vmem [shape: bf16[8,64], index: 0, kind: input, shape index: {}]
  %s1 = inlined_call_operand.vmem [shape: bf16[64,256], index: 1, kind: input, shape index: {}]
  %s2 = inlined_call_operand.vmem [shape: f32[1,128], index: 2, kind: input, shape index: {}]
  %s3 = inlined_call_operand.hbm [shape: bf16[128,256], index: 3, kind: input, shape index: {}]
  %s4 = inlined_call_operand.vmem [shape: f32[1,128], index: 4, kind: input, shape index: {}]
  %s5 = inlined_call_operand.vmem [shape: bf16[128,64], index: 5, kind: input, shape index: {}]
  %s6 = inlined_call_operand.vmem [shape: f32[1,64], index: 6, kind: input, shape index: {}]
  %s7 = inlined_call_operand.vmem [shape: bf16[1,64], index: 7, kind: input, shape index: {}]
  %s8 = inlined_call_operand.hbm [shape: f32[1,1,8], index: 8, kind: output, shape index: {}]
  %s9 = sld [smem:[#allocation0]]
  $region46: #{tpu_custom_call.1} parent=0
    _
  %s11 = ssub.s32 1, %s9
  %s12 = scalar_select 0, %s11, %s9
  $region1: #{tpu_custom_call.1} parent=0
    #allocation2 [shape = 'u8[65536]{0}', space=vmem, size = 0x10000, scoped, tag = 'input window, operand 3, single buffered']
    #allocation3 [shape = 's32[1]{0}', space=sflag, size = 0x4, scoped, tag = 'scoped memory for tpu_custom_call.1']
    #allocation4 [shape = 's32[1]{0}', space=sflag, size = 0x4, scoped, tag = 'scoped memory for tpu_custom_call.1']
    #allocation5 [shape = 'u8[512]{0}', space=vmem, size = 0x400, scoped, tag = 'output window, operand 0, single buffered']
    %13 = vsyncpa [#allocation3], 0
    %14 = vsyncpa [#allocation4], 0
    // Predicated region
    $region2: #{tpu_custom_call.1} parent=1 // pred_check
      _
    $region3: #{tpu_custom_call.1} parent=1 // pred_check_branch
      %16 = sbr.rel (0) target = $region5
    $region4: #{tpu_custom_call.1} parent=1 // pred_region
      _
    $region5: #{tpu_custom_call.1} parent=1 // pred_fallthru
      _
    // Predicated region
    $region6: #{tpu_custom_call.1} parent=1 // pred_check
      _
    $region7: #{tpu_custom_call.1} parent=1 // pred_check_branch
      %18 = sbr.rel (0) target = $region9
    $region8: #{tpu_custom_call.1} parent=1 // pred_region
      _
    $region9: #{tpu_custom_call.1} parent=1 // pred_fallthru
      _
    // Predicated region
    $region10: #{tpu_custom_call.1} parent=1 // pred_check
      _
    $region11: #{tpu_custom_call.1} parent=1 // pred_check_branch
      %20 = sbr.rel (0) target = $region13
    $region12: #{tpu_custom_call.1} parent=1 // pred_region
      _
    $region13: #{tpu_custom_call.1} parent=1 // pred_fallthru
      _
    // Predicated region
    $region14: #{tpu_custom_call.1} parent=1 // pred_check
      _
    $region15: #{tpu_custom_call.1} parent=1 // pred_check_branch
      %22 = sbr.rel (0) target = $region17
    $region16: #{tpu_custom_call.1} parent=1 // pred_region
      %s24 = ssub.s32 2048, 2048
      %25 = vsyncadd [#allocation3], %s24
      %s26 = sshll.u32 [#allocation2], 4
      %s27 = int_to_ptr.vmem [resolvable:$true] %s26
      %32 = dma.hbm_to_vmem [thread:$0]  %s3, 2048, %s27, [#allocation3], 128, 128, 8
    $region17: #{tpu_custom_call.1} parent=1 // pred_fallthru
      _
    // Predicated region
    $region18: #{tpu_custom_call.1} parent=1 // pred_check
      _
    $region19: #{tpu_custom_call.1} parent=1 // pred_check_branch
      %34 = sbr.rel (0) target = $region21
    $region20: #{tpu_custom_call.1} parent=1 // pred_region
      _
    $region21: #{tpu_custom_call.1} parent=1 // pred_fallthru
      _
    // Predicated region
    $region22: #{tpu_custom_call.1} parent=1 // pred_check
      _
    $region23: #{tpu_custom_call.1} parent=1 // pred_check_branch
      %36 = sbr.rel (0) target = $region25
    $region24: #{tpu_custom_call.1} parent=1 // pred_region
      _
    $region25: #{tpu_custom_call.1} parent=1 // pred_fallthru
      _
    // Predicated region
    $region26: #{tpu_custom_call.1} parent=1 // pred_check
      _
    $region27: #{tpu_custom_call.1} parent=1 // pred_check_branch
      %38 = sbr.rel (0) target = $region29
    $region28: #{tpu_custom_call.1} parent=1 // pred_region
      _
    $region29: #{tpu_custom_call.1} parent=1 // pred_fallthru
      _
    // Predicated region
    $region30: #{tpu_custom_call.1} parent=1 // pred_check
      _
    $region31: #{tpu_custom_call.1} parent=1 // pred_check_branch
      %40 = sbr.rel (0) target = $region33
    $region32: #{tpu_custom_call.1} parent=1 // pred_region
      _
    $region33: #{tpu_custom_call.1} parent=1 // pred_fallthru
      _
    // Predicated region
    $region34: #{tpu_custom_call.1} parent=1 // pred_check
      _
    $region35: #{tpu_custom_call.1} parent=1 // pred_check_branch
      %42 = sbr.rel (0) target = $region37
    $region36: #{tpu_custom_call.1} parent=1 // pred_region
      %43 = dma.done [#allocation3], 2048
    $region37: #{tpu_custom_call.1} parent=1 // pred_fallthru
      _
    %v45 = vld [vmem:[%s0] sm:$0xf]
    %v46 = vld [vmem:[%s1] sm:$0xff]
    %v47 = vld [vmem:[%s1 + $0x8] sm:$0xff]
    %v48 = vld [vmem:[%s1 + $0x10] sm:$0xff]
    %v49 = vld [vmem:[%s1 + $0x18] sm:$0xff]
    %v50 = vld [vmem:[%s1 + $0x20] sm:$0xff]
    %v51 = vld [vmem:[%s1 + $0x28] sm:$0xff]
    %v52 = vld [vmem:[%s1 + $0x30] sm:$0xff]
    %v53 = vld [vmem:[%s1 + $0x38] sm:$0xff]
    %v62 = vunpack.c.l.b16 %v46
    %v63 = vunpack.c.h.b16 %v46
    %v64 = vunpack.c.l.b16 %v47
    %v65 = vunpack.c.h.b16 %v47
    %v66 = vunpack.c.l.b16 %v48
    %v67 = vunpack.c.h.b16 %v48
    %v68 = vunpack.c.l.b16 %v49
    %v69 = vunpack.c.h.b16 %v49
    %v70 = vunpack.c.l.b16 %v50
    %v71 = vunpack.c.h.b16 %v50
    %v72 = vunpack.c.l.b16 %v51
    %v73 = vunpack.c.h.b16 %v51
    %v74 = vunpack.c.l.b16 %v52
    %v75 = vunpack.c.h.b16 %v52
    %v76 = vunpack.c.l.b16 %v53
    %v77 = vunpack.c.h.b16 %v53
    %v78 = vpack.c.b16 %v64, %v62
    %v79 = vpack.c.b16 %v65, %v63
    %v80 = vpack.c.b16 %v68, %v66
    %v81 = vpack.c.b16 %v69, %v67
    %v82 = vpack.c.b16 %v72, %v70
    %v83 = vpack.c.b16 %v73, %v71
    %v84 = vpack.c.b16 %v76, %v74
    %v85 = vpack.c.b16 %v77, %v75
    %vm94 = vcmask 523264
    %v96 = vsel %vm94, %v45, 0
    %98 = vmatprep.subr.bf16.mxu0 %v79
    %99 = vmatpush1.bf16.msra.mxu0 %v78
    %100 = vmatprep.subr.bf16.mxu0 %v81
    %101 = vmatpush1.bf16.msra.mxu0 %v80
    %102 = vmatprep.subr.bf16.mxu0 %v83
    %103 = vmatpush1.bf16.msra.mxu0 %v82
    %104 = vmatprep.subr.bf16.mxu0 %v85
    %105 = vmatpush1.bf16.msra.mxu0 %v84
    %106 = vmatprep.subr.bf16.mxu0 0
    %107 = vmatpush1.bf16.msra.mxu0 0
    %108 = vmatprep.subr.bf16.mxu0 0
    %109 = vmatpush1.bf16.msra.mxu0 0
    %110 = vmatprep.subr.bf16.mxu0 0
    %111 = vmatpush1.bf16.msra.mxu0 0
    %112 = vmatprep.subr.bf16.mxu0 0
    %113 = vmatpush1.bf16.msra.mxu0 0
    %114 = vmatprep.subr.bf16.mxu0 0
    %115 = vmatpush1.bf16.msra.mxu0 0
    %116 = vmatprep.subr.bf16.mxu0 0
    %117 = vmatpush1.bf16.msra.mxu0 0
    %118 = vmatprep.subr.bf16.mxu0 0
    %119 = vmatpush1.bf16.msra.mxu0 0
    %120 = vmatprep.subr.bf16.mxu0 0
    %121 = vmatpush1.bf16.msra.mxu0 0
    %122 = vmatprep.subr.bf16.mxu0 0
    %123 = vmatpush1.bf16.msra.mxu0 0
    %124 = vmatprep.subr.bf16.mxu0 0
    %125 = vmatpush1.bf16.msra.mxu0 0
    %126 = vmatprep.subr.bf16.mxu0 0
    %127 = vmatpush1.bf16.msra.mxu0 0
    %128 = vmatprep.subr.bf16.mxu0 0
    %129 = vmatpush1.bf16.msra.mxu0 0
    %130 = vmatprep.mubr.bf16.mxu0 0
    %131 = vmatmul.mubr.bf16.gmra.mrb[0].mxu0 %v96
    %v132 = vpop.f32.mrb[0].mxu0
    %v133 = vadd.f32 0.0, %v132
    %v134 = vpop.f32.mrb[0].mxu0
    %v135 = vadd.f32 0.0, %v134
    %v136 = vpop.f32.mrb[0].mxu0
    %v137 = vpop.f32.mrb[0].mxu0
    %138 = vdwg.mxu0
    %v139 = vmax.f32 %v133, %v135
    %v140 = vld [vmem:[%s2] sm:$0x1]
    %v142 = vlaneseq
    %v143 = vshrl.u32 %v142, 7
    %v144 = vsub.s32 0, %v143
    %v145 = vrot.slane %v140, %v144
    %v147 = vadd.f32 %v139, %v145
    %v148 = vmax.f32 %v147, 0.0
    %v149 = vpack.c.bf16 %v148, %v148
    %v150 = vld [vmem:[#allocation2] sm:$0xff]
    %v151 = vld [vmem:[#allocation2 + $0x8] sm:$0xff]
    %v152 = vld [vmem:[#allocation2 + $0x10] sm:$0xff]
    %v153 = vld [vmem:[#allocation2 + $0x18] sm:$0xff]
    %v154 = vld [vmem:[#allocation2 + $0x20] sm:$0xff]
    %v155 = vld [vmem:[#allocation2 + $0x28] sm:$0xff]
    %v156 = vld [vmem:[#allocation2 + $0x30] sm:$0xff]
    %v157 = vld [vmem:[#allocation2 + $0x38] sm:$0xff]
    %v158 = vld [vmem:[#allocation2 + $0x40] sm:$0xff]
    %v159 = vld [vmem:[#allocation2 + $0x48] sm:$0xff]
    %v160 = vld [vmem:[#allocation2 + $0x50] sm:$0xff]
    %v161 = vld [vmem:[#allocation2 + $0x58] sm:$0xff]
    %v162 = vld [vmem:[#allocation2 + $0x60] sm:$0xff]
    %v163 = vld [vmem:[#allocation2 + $0x68] sm:$0xff]
    %v164 = vld [vmem:[#allocation2 + $0x70] sm:$0xff]
    %v165 = vld [vmem:[#allocation2 + $0x78] sm:$0xff]
    %v182 = vunpack.c.l.b16 %v150
    %v183 = vunpack.c.h.b16 %v150
    %v184 = vunpack.c.l.b16 %v151
    %v185 = vunpack.c.h.b16 %v151
    %v186 = vunpack.c.l.b16 %v152
    %v187 = vunpack.c.h.b16 %v152
    %v188 = vunpack.c.l.b16 %v153
    %v189 = vunpack.c.h.b16 %v153
    %v190 = vunpack.c.l.b16 %v154
    %v191 = vunpack.c.h.b16 %v154
    %v192 = vunpack.c.l.b16 %v155
    %v193 = vunpack.c.h.b16 %v155
    %v194 = vunpack.c.l.b16 %v156
    %v195 = vunpack.c.h.b16 %v156
    %v196 = vunpack.c.l.b16 %v157
    %v197 = vunpack.c.h.b16 %v157
    %v198 = vunpack.c.l.b16 %v158
    %v199 = vunpack.c.h.b16 %v158
    %v200 = vunpack.c.l.b16 %v159
    %v201 = vunpack.c.h.b16 %v159
    %v202 = vunpack.c.l.b16 %v160
    %v203 = vunpack.c.h.b16 %v160
    %v204 = vunpack.c.l.b16 %v161
    %v205 = vunpack.c.h.b16 %v161
    %v206 = vunpack.c.l.b16 %v162
    %v207 = vunpack.c.h.b16 %v162
    %v208 = vunpack.c.l.b16 %v163
    %v209 = vunpack.c.h.b16 %v163
    %v210 = vunpack.c.l.b16 %v164
    %v211 = vunpack.c.h.b16 %v164
    %v212 = vunpack.c.l.b16 %v165
    %v213 = vunpack.c.h.b16 %v165
    %v214 = vpack.c.b16 %v184, %v182
    %v215 = vpack.c.b16 %v185, %v183
    %v216 = vpack.c.b16 %v188, %v186
    %v217 = vpack.c.b16 %v189, %v187
    %v218 = vpack.c.b16 %v192, %v190
    %v219 = vpack.c.b16 %v193, %v191
    %v220 = vpack.c.b16 %v196, %v194
    %v221 = vpack.c.b16 %v197, %v195
    %v222 = vpack.c.b16 %v200, %v198
    %v223 = vpack.c.b16 %v201, %v199
    %v224 = vpack.c.b16 %v204, %v202
    %v225 = vpack.c.b16 %v205, %v203
    %v226 = vpack.c.b16 %v208, %v206
    %v227 = vpack.c.b16 %v209, %v207
    %v228 = vpack.c.b16 %v212, %v210
    %v229 = vpack.c.b16 %v213, %v211
    %246 = vmatprep.subr.bf16.mxu0 %v215
    %247 = vmatpush1.bf16.msra.mxu0 %v214
    %248 = vmatprep.subr.bf16.mxu0 %v217
    %249 = vmatpush1.bf16.msra.mxu0 %v216
    %250 = vmatprep.subr.bf16.mxu0 %v219
    %251 = vmatpush1.bf16.msra.mxu0 %v218
    %252 = vmatprep.subr.bf16.mxu0 %v221
    %253 = vmatpush1.bf16.msra.mxu0 %v220
    %254 = vmatprep.subr.bf16.mxu0 %v223
    %255 = vmatpush1.bf16.msra.mxu0 %v222
    %256 = vmatprep.subr.bf16.mxu0 %v225
    %257 = vmatpush1.bf16.msra.mxu0 %v224
    %258 = vmatprep.subr.bf16.mxu0 %v227
    %259 = vmatpush1.bf16.msra.mxu0 %v226
    %260 = vmatprep.subr.bf16.mxu0 %v229
    %261 = vmatpush1.bf16.msra.mxu0 %v228
    %262 = vmatprep.subr.bf16.mxu0 0
    %263 = vmatpush1.bf16.msra.mxu0 0
    %264 = vmatprep.subr.bf16.mxu0 0
    %265 = vmatpush1.bf16.msra.mxu0 0
    %266 = vmatprep.subr.bf16.mxu0 0
    %267 = vmatpush1.bf16.msra.mxu0 0
    %268 = vmatprep.subr.bf16.mxu0 0
    %269 = vmatpush1.bf16.msra.mxu0 0
    %270 = vmatprep.subr.bf16.mxu0 0
    %271 = vmatpush1.bf16.msra.mxu0 0
    %272 = vmatprep.subr.bf16.mxu0 0
    %273 = vmatpush1.bf16.msra.mxu0 0
    %274 = vmatprep.subr.bf16.mxu0 0
    %275 = vmatpush1.bf16.msra.mxu0 0
    %276 = vmatprep.subr.bf16.mxu0 0
    %277 = vmatpush1.bf16.msra.mxu0 0
    %278 = vmatprep.mubr.bf16.mxu0 0
    %279 = vmatmul.mubr.bf16.gmra.mrb[0].mxu0 %v149
    %v280 = vpop.f32.mrb[0].mxu0
    %v281 = vadd.f32 0.0, %v280
    %v282 = vpop.f32.mrb[0].mxu0
    %v283 = vadd.f32 0.0, %v282
    %v284 = vpop.f32.mrb[0].mxu0
    %v285 = vpop.f32.mrb[0].mxu0
    %286 = vdwg.mxu0
    %v287 = vmax.f32 %v281, %v283
    %v288 = vld [vmem:[%s4] sm:$0x1]
    %v290 = vlaneseq
    %v291 = vshrl.u32 %v290, 7
    %v292 = vsub.s32 0, %v291
    %v293 = vrot.slane %v288, %v292
    %v295 = vadd.f32 %v287, %v293
    %v296 = vmax.f32 %v295, 0.0
    %v297 = vpack.c.bf16 %v296, %v296
    %v298 = vld [vmem:[%s5] sm:$0xf]
    %v299 = vld [vmem:[%s5 + $0x4] sm:$0xf]
    %v300 = vld [vmem:[%s5 + $0x8] sm:$0xf]
    %v301 = vld [vmem:[%s5 + $0xc] sm:$0xf]
    %v302 = vld [vmem:[%s5 + $0x10] sm:$0xf]
    %v303 = vld [vmem:[%s5 + $0x14] sm:$0xf]
    %v304 = vld [vmem:[%s5 + $0x18] sm:$0xf]
    %v305 = vld [vmem:[%s5 + $0x1c] sm:$0xf]
    %v306 = vld [vmem:[%s5 + $0x20] sm:$0xf]
    %v307 = vld [vmem:[%s5 + $0x24] sm:$0xf]
    %v308 = vld [vmem:[%s5 + $0x28] sm:$0xf]
    %v309 = vld [vmem:[%s5 + $0x2c] sm:$0xf]
    %v310 = vld [vmem:[%s5 + $0x30] sm:$0xf]
    %v311 = vld [vmem:[%s5 + $0x34] sm:$0xf]
    %v312 = vld [vmem:[%s5 + $0x38] sm:$0xf]
    %v313 = vld [vmem:[%s5 + $0x3c] sm:$0xf]
    %v314 = vld [vmem:[%s6] sm:$0x1]
    %v316 = vlaneseq
    %v317 = vshrl.u32 %v316, 7
    %v318 = vsub.s32 0, %v317
    %v319 = vrot.slane %v314, %v318
    %v337 = vunpack.c.l.b16 %v298
    %v338 = vunpack.c.l.b16 %v299
    %v339 = vunpack.c.l.b16 %v300
    %v340 = vunpack.c.l.b16 %v301
    %v341 = vunpack.c.l.b16 %v302
    %v342 = vunpack.c.l.b16 %v303
    %v343 = vunpack.c.l.b16 %v304
    %v344 = vunpack.c.l.b16 %v305
    %v345 = vunpack.c.l.b16 %v306
    %v346 = vunpack.c.l.b16 %v307
    %v347 = vunpack.c.l.b16 %v308
    %v348 = vunpack.c.l.b16 %v309
    %v349 = vunpack.c.l.b16 %v310
    %v350 = vunpack.c.l.b16 %v311
    %v351 = vunpack.c.l.b16 %v312
    %v352 = vunpack.c.l.b16 %v313
    %v353 = vpack.c.b16 %v338, %v337
    %v354 = vpack.c.b16 %v340, %v339
    %v355 = vpack.c.b16 %v342, %v341
    %v356 = vpack.c.b16 %v344, %v343
    %v357 = vpack.c.b16 %v346, %v345
    %v358 = vpack.c.b16 %v348, %v347
    %v359 = vpack.c.b16 %v350, %v349
    %v360 = vpack.c.b16 %v352, %v351
    %369 = vmatprep.subr.bf16.mxu0 0
    %370 = vmatpush1.bf16.msra.mxu0 %v353
    %371 = vmatprep.subr.bf16.mxu0 0
    %372 = vmatpush1.bf16.msra.mxu0 %v354
    %373 = vmatprep.subr.bf16.mxu0 0
    %374 = vmatpush1.bf16.msra.mxu0 %v355
    %375 = vmatprep.subr.bf16.mxu0 0
    %376 = vmatpush1.bf16.msra.mxu0 %v356
    %377 = vmatprep.subr.bf16.mxu0 0
    %378 = vmatpush1.bf16.msra.mxu0 %v357
    %379 = vmatprep.subr.bf16.mxu0 0
    %380 = vmatpush1.bf16.msra.mxu0 %v358
    %381 = vmatprep.subr.bf16.mxu0 0
    %382 = vmatpush1.bf16.msra.mxu0 %v359
    %383 = vmatprep.subr.bf16.mxu0 0
    %384 = vmatpush1.bf16.msra.mxu0 %v360
    %385 = vmatprep.subr.bf16.mxu0 0
    %386 = vmatpush1.bf16.msra.mxu0 0
    %387 = vmatprep.subr.bf16.mxu0 0
    %388 = vmatpush1.bf16.msra.mxu0 0
    %389 = vmatprep.subr.bf16.mxu0 0
    %390 = vmatpush1.bf16.msra.mxu0 0
    %391 = vmatprep.subr.bf16.mxu0 0
    %392 = vmatpush1.bf16.msra.mxu0 0
    %393 = vmatprep.subr.bf16.mxu0 0
    %394 = vmatpush1.bf16.msra.mxu0 0
    %395 = vmatprep.subr.bf16.mxu0 0
    %396 = vmatpush1.bf16.msra.mxu0 0
    %397 = vmatprep.subr.bf16.mxu0 0
    %398 = vmatpush1.bf16.msra.mxu0 0
    %399 = vmatprep.subr.bf16.mxu0 0
    %400 = vmatpush1.bf16.msra.mxu0 0
    %401 = vmatprep.mubr.bf16.mxu0 0
    %402 = vmatmul.mubr.bf16.gmra.mrb[0].mxu0 %v297
    %v403 = vpop.f32.mrb[0].mxu0
    %v404 = vadd.f32 %v319, %v403
    %v405 = vpop.f32.mrb[0].mxu0
    %v406 = vpop.f32.mrb[0].mxu0
    %v407 = vpop.f32.mrb[0].mxu0
    %408 = vdwg.mxu0
    %v409 = vmax.f32 %v404, 0.0
    %v410 = vpack.c.bf16 %v409, %v409
    %v411 = vld [vmem:[%s7] sm:$0x1]
    %v413 = vsel %vm94, %v411, 0
    %v416 = vsel %vm94, %v410, 0
    %418 = vmatprep.subr.bf16.mxu0 0
    %419 = vmatpush1.bf16.xpose.msra.mxu0 %v416
    %420 = vmatprep.subr.bf16.mxu0 0
    %421 = vmatpush1.bf16.xpose.msra.mxu0 0
    %422 = vmatprep.subr.bf16.mxu0 0
    %423 = vmatpush1.bf16.xpose.msra.mxu0 0
    %424 = vmatprep.subr.bf16.mxu0 0
    %425 = vmatpush1.bf16.xpose.msra.mxu0 0
    %426 = vmatprep.subr.bf16.mxu0 0
    %427 = vmatpush1.bf16.xpose.msra.mxu0 0
    %428 = vmatprep.subr.bf16.mxu0 0
    %429 = vmatpush1.bf16.xpose.msra.mxu0 0
    %430 = vmatprep.subr.bf16.mxu0 0
    %431 = vmatpush1.bf16.xpose.msra.mxu0 0
    %432 = vmatprep.subr.bf16.mxu0 0
    %433 = vmatpush1.bf16.xpose.msra.mxu0 0
    %434 = vmatprep.subr.bf16.mxu0 0
    %435 = vmatpush1.bf16.xpose.msra.mxu0 0
    %436 = vmatprep.subr.bf16.mxu0 0
    %437 = vmatpush1.bf16.xpose.msra.mxu0 0
    %438 = vmatprep.subr.bf16.mxu0 0
    %439 = vmatpush1.bf16.xpose.msra.mxu0 0
    %440 = vmatprep.subr.bf16.mxu0 0
    %441 = vmatpush1.bf16.xpose.msra.mxu0 0
    %442 = vmatprep.subr.bf16.mxu0 0
    %443 = vmatpush1.bf16.xpose.msra.mxu0 0
    %444 = vmatprep.subr.bf16.mxu0 0
    %445 = vmatpush1.bf16.xpose.msra.mxu0 0
    %446 = vmatprep.subr.bf16.mxu0 0
    %447 = vmatpush1.bf16.xpose.msra.mxu0 0
    %448 = vmatprep.subr.bf16.mxu0 0
    %449 = vmatpush1.bf16.xpose.msra.mxu0 0
    %450 = vmatprep.mubr.bf16.mxu0 0
    %451 = vmatmul.mubr.bf16.gmra.mrb[0].mxu0 %v413
    %v452 = vpop.f32.mrb[0].mxu0
    %v453 = vadd.f32 0.0, %v452
    %v454 = vpop.f32.mrb[0].mxu0
    %v455 = vpop.f32.mrb[0].mxu0
    %v456 = vpop.f32.mrb[0].mxu0
    %457 = vdwg.mxu0
    %vm458 = vcmask 57344
    %459 = vst.msk [vmem:[#allocation5] sm:$0x1] %vm458, %v453
    // Predicated region
    $region38: #{tpu_custom_call.1} parent=1 // pred_check
      _
    $region39: #{tpu_custom_call.1} parent=1 // pred_check_branch
      %461 = sbr.rel (0) target = $region41
    $region40: #{tpu_custom_call.1} parent=1 // pred_region
      %s463 = ssub.s32 16, 16
      %464 = vsyncadd [#allocation4], %s463
      %s466 = sshll.u32 [#allocation5], 4
      %s467 = int_to_ptr.vmem [resolvable:$true] %s466
      %469 = dma.vmem_to_hbm [thread:$0]  %s467, 16, %s8, [#allocation4]
    $region41: #{tpu_custom_call.1} parent=1 // pred_fallthru
      _
    // Predicated region
    $region42: #{tpu_custom_call.1} parent=1 // pred_check
      _
    $region43: #{tpu_custom_call.1} parent=1 // pred_check_branch
      %471 = sbr.rel (0) target = $region45
    $region44: #{tpu_custom_call.1} parent=1 // pred_region
      %472 = dma.done [#allocation4], 16
    $region45: #{tpu_custom_call.1} parent=1 // pred_fallthru
      _
    %473 = vsyncpa [#allocation3], 1
    %474 = vsyncpa [#allocation4], 1

</llo_original>
